<compile_context>
chip_gen: v5e
topology: v5e:2x2
jax: 0.10.0
libtpu: 0.0.40
codegen_flags: <defaults>
</compile_context>

<pallas_src>
import functools

import jax
import jax.numpy as jnp
from jax import lax
from jax.experimental import pallas as pl
from jax.experimental.pallas import tpu as pltpu

GAMMA = 2.0
EPS = 1e-10  # kept for the reference only; mathematically cancels in the kernel


def _round_up(x, m):
    return ((x + m - 1) // m) * m


def _focal_ce_sum_kernel(logits_ref, targets_ref, out_ref, *,
                         n_rows, tile_n, bpc, needs_mask):
    """Accumulates sum_i CE_i over row-blocks into a per-partial (1,1) block."""
    i = pl.program_id(1)  # reduction (arbitrary) axis

    @pl.when(i == 0)
    def _init():
        out_ref[...] = jnp.zeros_like(out_ref)

    x = logits_ref[...].astype(jnp.float32)                      # [tile_n, C]
    tn, c = x.shape

    # numerically stable per-row CE; the max term cancels between lse and tgt
    m = jnp.max(x, axis=-1, keepdims=True)                       # [tile_n, 1]
    xm = x - m                                                   # [tile_n, C]

    # one-hot gather of the target logit: (1,C) iota vs (tile_n,1) targets
    col = lax.broadcasted_iota(jnp.int32, (1, c), 1)             # [1, C]
    onehot = col == targets_ref[...]                             # [tile_n, C]
    tgt_rel = jnp.sum(jnp.where(onehot, xm, 0.0), axis=-1, keepdims=True)

    lse_rel = jnp.log(jnp.sum(jnp.exp(xm), axis=-1, keepdims=True))
    ce = lse_rel - tgt_rel                                       # [tile_n, 1]

    if needs_mask:
        # zero out rows that are padding past the true batch size
        blk = pl.program_id(0) * bpc + i
        row = blk * tile_n + lax.broadcasted_iota(jnp.int32, (tn, 1), 0)
        ce = jnp.where(row < n_rows, ce, 0.0)

    out_ref[...] += jnp.sum(ce, axis=0, keepdims=True)           # (1,1) accumulator


def focal_loss(y_pred, y_true, *, tile_n=None):
    """y_pred: [N, C] float logits (f32/bf16/f16), y_true: [N] integer class labels."""
    n, c = y_pred.shape

    # Pallas TPU has no f64 path: downcast anything non-float or wider than f32.
    if (not jnp.issubdtype(y_pred.dtype, jnp.floating)
            or jnp.dtype(y_pred.dtype).itemsize > 4):
        y_pred = y_pred.astype(jnp.float32)
    itemsize = jnp.dtype(y_pred.dtype).itemsize
    packing = max(8, 32 // itemsize)          # sublane packing: 8 f32, 16 bf16, 32 int8

    if tile_n is None:
        # 32 MiB budget for the double-buffered inputs: 2 logits tiles of
        # [tile_n, C] plus 2 lane-padded [tile_n, 1] int32 target tiles
        # (128 lanes * 4 B = 512 B/row in VMEM).  Stays well under the 48 MiB
        # scoped limit below, which itself fits v7x's 64 MiB/TC VMEM.
        budget_bytes = 32 * 1024 * 1024
        per_row = 2 * c * itemsize + 2 * 512
        tile_n = budget_bytes // per_row
    tile_n = int(max(packing, min(8192, (int(tile_n) // packing) * packing)))
    tile_n = min(tile_n, _round_up(n, packing))

    num_blocks = pl.cdiv(n, tile_n)
    num_partials = 2 if num_blocks >= 2 else 1   # 2 -> both TensorCores on v7x
    bpc = pl.cdiv(num_blocks, num_partials)      # blocks per partial
    n_pad = num_partials * bpc * tile_n
    needs_mask = n_pad != n

    targets = y_true.astype(jnp.int32).reshape(n, 1)
    if needs_mask:
        y_pred = jnp.pad(y_pred, ((0, n_pad - n), (0, 0)))
        targets = jnp.pad(targets, ((0, n_pad - n), (0, 0)))

    kernel = functools.partial(
        _focal_ce_sum_kernel,
        n_rows=n, tile_n=tile_n, bpc=bpc, needs_mask=needs_mask,
    )

    partials = pl.pallas_call(
        kernel,
        out_shape=jax.ShapeDtypeStruct((num_partials, 1, 1), jnp.float32),
        grid=(num_partials, bpc),
        in_specs=[
            pl.BlockSpec((tile_n, c), lambda p, i: (p * bpc + i, 0)),
            # NOTE: [tile_n, 1] int32 pads each row to 128 lanes in VMEM; kept
            # (vs a lane-dense layout) because the one-hot compare needs the
            # target varying along sublanes and a lane->sublane relayout is not
            # a guaranteed lowering.  Cost is accounted for in the tile budget.
            pl.BlockSpec((tile_n, 1), lambda p, i: (p * bpc + i, 0)),
        ],
        # same block per partial across the reduction axis -> resident accumulator
        out_specs=pl.BlockSpec((None, 1, 1), lambda p, i: (p, 0, 0)),
        compiler_params=pltpu.CompilerParams(
            dimension_semantics=("parallel", "arbitrary"),
            vmem_limit_bytes=48 * 1024 * 1024,   # < 64 MiB/TC on v7x; ample on v5e/v6e
        ),
    )(y_pred, targets)

    # Finalize (scalar) in the wrapper: mean CE, then the focal transform.
    ce_sum = jnp.sum(partials, dtype=jnp.float32)
    L = ce_sum / jnp.float32(n)
    p = jnp.exp(-L)
    return jnp.square(1.0 - p) * L               # gamma == 2 -> square


def focal_loss_ref(y_pred, y_true):
    # pure-JAX reference (mirrors the PyTorch module, including the +eps)
    x = y_pred.astype(jnp.float32) + EPS
    lse = jax.scipy.special.logsumexp(x, axis=-1)
    tgt = jnp.take_along_axis(x, y_true.astype(jnp.int32)[:, None], axis=-1)[:, 0]
    L = jnp.mean(lse - tgt)
    p = jnp.exp(-L)
    return (1.0 - p) ** GAMMA * L


if __name__ == "__main__":
    key = jax.random.PRNGKey(0)
    k1, k2 = jax.random.split(key)

    # small shapes consistent with the module: a batch of logits over 32 classes
    N, C = 8, 32
    y_pred = jax.random.normal(k1, (N, C), dtype=jnp.float32)
    y_true = jax.random.randint(k2, (N,), 0, C, dtype=jnp.int32)

    loss = focal_loss(y_pred, y_true)
    jax.block_until_ready(loss)
    ref = focal_loss_ref(y_pred, y_true)
    assert jnp.allclose(loss, ref, rtol=1e-5, atol=1e-5), (loss, ref)

    # exercise the multi-block / dual-partial / masked path with bf16 logits
    k3, k4 = jax.random.split(k2)
    N2, C2 = 300, 64
    y_pred2 = jax.random.normal(k3, (N2, C2), dtype=jnp.bfloat16)
    y_true2 = jax.random.randint(k4, (N2,), 0, C2, dtype=jnp.int32)
    loss2 = focal_loss(y_pred2, y_true2, tile_n=128)
    jax.block_until_ready(loss2)
    ref2 = focal_loss_ref(y_pred2, y_true2)
    assert jnp.allclose(loss2, ref2, rtol=1e-4, atol=1e-4), (loss2, ref2)

    print("KERNEL_OK")
</pallas_src>

<mosaic_0001>
module attributes {stable_mosaic.version = 11 : i64} {
  func.func @_focal_ce_sum_kernel(%arg0: i32, %arg1: i32, %arg2: memref<8x32xf32, #tpu.memory_space<vmem>>, %arg3: memref<8x1xi32, #tpu.memory_space<vmem>>, %arg4: memref<1x1x1xf32, #tpu.memory_space<vmem>>) attributes {dimension_semantics = [#tpu.dimension_semantics<parallel>, #tpu.dimension_semantics<arbitrary>], iteration_bounds = array<i64: 1, 1>, scalar_prefetch = 0 : i64, scratch_operands = 0 : i64, tpu.core_type = #tpu.core_type<tc>, window_params = [{transform_indices = @transform_0, window_bounds = array<i64: 8, 32>}, {transform_indices = @transform_1, window_bounds = array<i64: 8, 1>}, {transform_indices = @transform_2, window_bounds = array<i64: 1, 1, 1>}]} {
    %c0_i32 = arith.constant 0 : i32
    %0 = arith.cmpi eq, %arg1, %c0_i32 : i32
    %1 = arith.extui %0 : i1 to i32
    %c0_i32_0 = arith.constant 0 : i32
    %2 = arith.cmpi ne, %1, %c0_i32_0 : i32
    scf.if %2 {
      %cst_14 = arith.constant 0.000000e+00 : f32
      %30 = vector.broadcast %cst_14 : f32 to vector<1x1xf32>
      %c0_15 = arith.constant 0 : index
      %c0_16 = arith.constant 0 : index
      %c0_17 = arith.constant 0 : index
      %31 = vector.load %arg4[%c0_15, %c0_16, %c0_17] : memref<1x1x1xf32, #tpu.memory_space<vmem>>, vector<1x1x1xf32>
      %32 = vector.shape_cast %31 : vector<1x1x1xf32> to vector<1x1xf32>
      %33 = vector.shape_cast %30 : vector<1x1xf32> to vector<1x1x1xf32>
      tpu.vector_store %arg4[%c0_15, %c0_16, %c0_17], %33 {strides = array<i32>} : memref<1x1x1xf32, #tpu.memory_space<vmem>>, vector<1x1x1xf32>,
    } else {
    }
    %c0 = arith.constant 0 : index
    %c0_1 = arith.constant 0 : index
    %3 = vector.load %arg2[%c0, %c0_1] : memref<8x32xf32, #tpu.memory_space<vmem>>, vector<8x32xf32>
    %cst = arith.constant dense<0xFF800000> : vector<8xf32>
    %4 = vector.multi_reduction <maximumf>, %3, %cst [1] : vector<8x32xf32> to vector<8xf32>
    %5 = vector.shape_cast %4 : vector<8xf32> to vector<8x1xf32>
    %6 = vector.broadcast %5 : vector<8x1xf32> to vector<8x32xf32>
    %7 = arith.subf %3, %6 : vector<8x32xf32>
    %8 = tpu.iota {dimensions = array<i32: 1>} : vector<1x32xi32>
    %c0_2 = arith.constant 0 : index
    %c0_3 = arith.constant 0 : index
    %9 = vector.load %arg3[%c0_2, %c0_3] : memref<8x1xi32, #tpu.memory_space<vmem>>, vector<8x1xi32>
    %10 = vector.broadcast %8 : vector<1x32xi32> to vector<8x32xi32>
    %11 = vector.broadcast %9 : vector<8x1xi32> to vector<8x32xi32>
    %12 = arith.cmpi eq, %10, %11 : vector<8x32xi32>
    %cst_4 = arith.constant 0.000000e+00 : f32
    %13 = vector.broadcast %cst_4 : f32 to vector<8x32xf32>
    %14 = arith.select %12, %7, %13 : vector<8x32xi1>, vector<8x32xf32>
    %cst_5 = arith.constant dense<0.000000e+00> : vector<8xf32>
    %15 = vector.multi_reduction <add>, %14, %cst_5 [1] : vector<8x32xf32> to vector<8xf32>
    %16 = vector.shape_cast %15 : vector<8xf32> to vector<8x1xf32>
    %17 = math.exp %7 : vector<8x32xf32>
    %cst_6 = arith.constant dense<0.000000e+00> : vector<8xf32>
    %18 = vector.multi_reduction <add>, %17, %cst_6 [1] : vector<8x32xf32> to vector<8xf32>
    %19 = vector.shape_cast %18 : vector<8xf32> to vector<8x1xf32>
    %20 = math.log %19 : vector<8x1xf32>
    %21 = arith.subf %20, %16 : vector<8x1xf32>
    %c0_7 = arith.constant 0 : index
    %c0_8 = arith.constant 0 : index
    %c0_9 = arith.constant 0 : index
    %22 = vector.load %arg4[%c0_7, %c0_8, %c0_9] : memref<1x1x1xf32, #tpu.memory_space<vmem>>, vector<1x1x1xf32>
    %23 = vector.shape_cast %22 : vector<1x1x1xf32> to vector<1x1xf32>
    %cst_10 = arith.constant dense<0.000000e+00> : vector<1xf32>
    %24 = vector.multi_reduction <add>, %21, %cst_10 [0] : vector<8x1xf32> to vector<1xf32>
    %25 = vector.shape_cast %24 : vector<1xf32> to vector<1x1xf32>
    %26 = arith.addf %23, %25 : vector<1x1xf32>
    %c0_11 = arith.constant 0 : index
    %c0_12 = arith.constant 0 : index
    %c0_13 = arith.constant 0 : index
    %27 = vector.load %arg4[%c0_11, %c0_12, %c0_13] : memref<1x1x1xf32, #tpu.memory_space<vmem>>, vector<1x1x1xf32>
    %28 = vector.shape_cast %27 : vector<1x1x1xf32> to vector<1x1xf32>
    %29 = vector.shape_cast %26 : vector<1x1xf32> to vector<1x1x1xf32>
    tpu.vector_store %arg4[%c0_11, %c0_12, %c0_13], %29 {strides = array<i32>} : memref<1x1x1xf32, #tpu.memory_space<vmem>>, vector<1x1x1xf32>,
    return
  }
  func.func @transform_0(%arg0: i32, %arg1: i32) -> (i32, i32) {
    %c1_i32 = arith.constant 1 : i32
    %0 = arith.muli %arg0, %c1_i32 : i32
    %1 = arith.addi %0, %arg1 : i32
    %c0_i32 = arith.constant 0 : i32
    %c0_i32_0 = arith.constant 0 : i32
    return %1, %c0_i32 : i32, i32
  }
  func.func @transform_1(%arg0: i32, %arg1: i32) -> (i32, i32) {
    %c1_i32 = arith.constant 1 : i32
    %0 = arith.muli %arg0, %c1_i32 : i32
    %1 = arith.addi %0, %arg1 : i32
    %c0_i32 = arith.constant 0 : i32
    %c0_i32_0 = arith.constant 0 : i32
    return %1, %c0_i32 : i32, i32
  }
  func.func @transform_2(%arg0: i32, %arg1: i32) -> (i32, i32, i32) {
    %c0_i32 = arith.constant 0 : i32
    %c0_i32_0 = arith.constant 0 : i32
    %c0_i32_1 = arith.constant 0 : i32
    return %arg0, %c0_i32, %c0_i32_0 : i32, i32, i32
  }
}

</mosaic_0001>

<llo_original>
// kernel: tpu_custom_call.1
$region0: #{tpu_custom_call.1}
  #allocation0 [shape = 'u32[]', space=smem, size = 0x4, offset = 0x4, fixed_abs, tag = 'smem constant byte address 0x4 - core index']
  #allocation1 [shape = 'u32[72,128]{1,0:T(1,128)}', space=vmem, size = 0x9000, scoped, tag = 'internal scratch']
  %s0 = inlined_call_operand.vmem [shape: f32[8,32], index: 0, kind: input, shape index: {}]
  %s1 = inlined_call_operand.vmem [shape: s32[8,1], index: 1, kind: input, shape index: {}]
  %s2 = inlined_call_operand.hbm [shape: f32[1,1,1], index: 2, kind: output, shape index: {}]
  %s3 = sld [smem:[#allocation0]]
  $region22: #{tpu_custom_call.1} parent=0
    _
  %s5 = ssub.s32 1, %s3
  %s6 = scalar_select 0, %s5, %s3
  $region1: #{tpu_custom_call.1} parent=0
    #allocation2 [shape = 'u8[512]{0}', space=vmem, size = 0x400, scoped, tag = 'output window, operand 0, single buffered']
    #allocation3 [shape = 's32[1]{0}', space=sflag, size = 0x4, scoped, tag = 'scoped memory for tpu_custom_call.1']
    %7 = vsyncpa [#allocation3], 0
    // Predicated region
    $region2: #{tpu_custom_call.1} parent=1 // pred_check
      _
    $region3: #{tpu_custom_call.1} parent=1 // pred_check_branch
      %9 = sbr.rel (0) target = $region5
    $region4: #{tpu_custom_call.1} parent=1 // pred_region
      %s10 = sadd.s32 0, 0
      %p11 = scmp.lt.s32.totalorder %s10, 0
      %s12 = scalar_select %p11, %s10, 0
      %s13 = smul.addr %s12, 8
      %s14 = scalar_lea.vmem %s0, %s13
      %s15 = sadd.s32 0, 0
    $region5: #{tpu_custom_call.1} parent=1 // pred_fallthru
      _
    // Predicated region
    $region6: #{tpu_custom_call.1} parent=1 // pred_check
      _
    $region7: #{tpu_custom_call.1} parent=1 // pred_check_branch
      %17 = sbr.rel (0) target = $region9
    $region8: #{tpu_custom_call.1} parent=1 // pred_region
      %s18 = sadd.s32 0, 0
      %p19 = scmp.lt.s32.totalorder %s18, 0
      %s20 = scalar_select %p19, %s18, 0
      %s21 = smul.addr %s20, 8
      %s22 = scalar_lea.vmem %s1, %s21
      %s23 = sadd.s32 0, 0
    $region9: #{tpu_custom_call.1} parent=1 // pred_fallthru
      _
    %s24 = sadd.s32 0, 0
    %p25 = scmp.lt.s32.totalorder %s24, 0
    %s26 = scalar_select %p25, %s24, 0
    %s27 = smul.addr %s26, 8
    %s28 = scalar_lea.vmem %s0, %s27
    %s29 = sadd.s32 0, 0
    %p30 = scmp.lt.s32.totalorder %s29, 0
    %s31 = scalar_select %p30, %s29, 0
    %s32 = smul.addr %s31, 8
    %s33 = scalar_lea.vmem %s1, %s32
    %s34 = sadd.s32 0, 0
    %p35 = scmp.lt.s32.totalorder %s34, 0
    %s36 = scalar_select %p35, %s34, 0
    %s37 = smul.addr %s36, 8
    %s38 = scalar_lea.vmem %s0, %s37
    %s39 = sadd.s32 0, 0
    %s40 = sadd.s32 0, 0
    %p41 = scmp.lt.s32.totalorder %s40, 0
    %s42 = scalar_select %p41, %s40, 0
    %s43 = smul.addr %s42, 8
    %s44 = scalar_lea.vmem %s1, %s43
    %s45 = sadd.s32 0, 0
    %p46 = scmp.eq.s32.totalorder 0, 0
    // Predicated region
    $region10: #{tpu_custom_call.1} parent=1 // pred_check
      %p47 = pneg %p46
    $region11: #{tpu_custom_call.1} parent=1 // pred_check_branch
      %49 = sbr.rel (%p47) target = $region13
    $region12: #{tpu_custom_call.1} parent=1 // pred_region
      %vm50 = vcmask 0
      %51 = vst.msk [vmem:[#allocation2] sm:$0x1] %vm50, 0.0
    $region13: #{tpu_custom_call.1} parent=1 // pred_fallthru
      _
    %v52 = vld [vmem:[%s38] sm:$0xff]
    %vm53 = vcmask 261120
    %v54 = vsel %vm53, %v52, -inf
    %55 = vmax.xlane.f32.xlu0 %v54
    %v56 = vpop.xlane.xlu0 %55
    %v57 = vsub.f32 %v52, %v56
    %v58 = vlaneseq
    %v59 = vand.u32 %v58, 127
    %v60 = vld [vmem:[%s44] sm:$0xff]
    %61 = vset.pattern.permute.xlu0 0
    %62 = vperm.xlu0 %61, %v60
    %v63 = vpop.permute.xlu0 %62
    %vm64 = vcmp.eq.s32.totalorder %v59, %v63
    %v65 = vsel %vm64, %v57, 0.0
    %v66 = vsel %vm53, %v65, 0.0
    %67 = vadd.xlane.f32.xlu0 %v66
    %v68 = vpop.xlane.xlu0 %67
    %v69 = vmul.f32 %v57, 1.442695
    %v70 = vpow.pop %v69
    %v71 = vsel %vm53, %v70, 0.0
    %72 = vadd.xlane.f32.xlu0 %v71
    %v73 = vpop.xlane.xlu0 %72
    %v74 = vlog2.pop %v73
    %v75 = vmul.f32 %v74, 0.6931472
    %v76 = vsub.f32 %v75, %v68
    %v77 = vld [vmem:[#allocation2] sm:$0x1]
    %v78 = vrot.slane %v76, 4
    %v79 = vadd.f32 %v76, %v78
    %v80 = vrot.slane %v79, 2
    %v81 = vadd.f32 %v79, %v80
    %v82 = vrot.slane %v81, 1
    %v83 = vadd.f32 %v81, %v82
    %v84 = vadd.f32 %v77, %v83
    %vm85 = vcmask 0
    %86 = vst.msk [vmem:[#allocation2] sm:$0x1] %vm85, %v84
    // Predicated region
    $region14: #{tpu_custom_call.1} parent=1 // pred_check
      _
    $region15: #{tpu_custom_call.1} parent=1 // pred_check_branch
      %88 = sbr.rel (0) target = $region17
    $region16: #{tpu_custom_call.1} parent=1 // pred_region
      %90 = vsyncadd [#allocation3], 0
      %s92 = sshll.u32 [#allocation2], 4
      %s93 = int_to_ptr.vmem [resolvable:$true] %s92
      %s94 = sshll.u32 %s2, 4
      %s95 = int_to_ptr.hbm [resolvable:$true] %s94
      %97 = dma.vmem_to_hbm [thread:$0]  %s93, 16, %s95, [#allocation3]
    $region17: #{tpu_custom_call.1} parent=1 // pred_fallthru
      _
    // Predicated region
    $region18: #{tpu_custom_call.1} parent=1 // pred_check
      _
    $region19: #{tpu_custom_call.1} parent=1 // pred_check_branch
      %99 = sbr.rel (0) target = $region21
    $region20: #{tpu_custom_call.1} parent=1 // pred_region
      %101 = dma.done [#allocation3], 16
    $region21: #{tpu_custom_call.1} parent=1 // pred_fallthru
      _
    %102 = vsyncpa [#allocation3], 1

</llo_original>
